<compile_context>
chip_gen: v7x
topology: tpu7x:2x2x1
jax: 0.10.0
libtpu: 0.0.40
codegen_flags: <defaults>
</compile_context>

<pallas_src>
import jax
import jax.numpy as jnp
from jax.experimental import pallas as pl
from jax.experimental.pallas import tpu as pltpu
import numpy as np

PROCESSED_SIZE = 64
COMM_LEN = 10
PAD = 128  # every feature dim padded to one full lane width

# (in, out) for each Linear layer, encoder then decoder (true, unpadded dims).
ENC_DIMS = [(PROCESSED_SIZE, 128), (128, 64), (64, 32), (32, COMM_LEN)]
DEC_DIMS = [(COMM_LEN, 32), (32, 64), (64, 128), (128, PROCESSED_SIZE)]
ALL_DIMS = ENC_DIMS + DEC_DIMS
N_LAYERS = len(ALL_DIMS)  # 8


def _round_up(x, m):
    return (x + m - 1) // m * m


def _encdec_kernel(feat_ref, w_ref, b_ref, enc_ref, dec_ref):
    """feat_ref: bf16 [tile, 128]   (lanes >= PROCESSED_SIZE are zero)
    w_ref   : bf16 [8, 128, 128] (zero-padded, [in, out] layout per layer)
    b_ref   : f32  [8, 1, 128]   (zero-padded)
    enc_ref : f32  [tile, 128]   (lanes >= COMM_LEN end up exactly 0)
    dec_ref : f32  [tile, 128]   (lanes >= PROCESSED_SIZE end up exactly 0)
    """
    x = feat_ref[...]  # bf16 [tile, 128]

    # ---- encoder: (Linear + ReLU) x3, Linear + Tanh ----
    for i in range(3):
        acc = jnp.dot(x, w_ref[i], preferred_element_type=jnp.float32)
        acc = jnp.maximum(acc + b_ref[i], 0.0)
        x = acc.astype(jnp.bfloat16)
    acc = jnp.dot(x, w_ref[3], preferred_element_type=jnp.float32)
    enc = jnp.tanh(acc + b_ref[3])                # padded lanes: tanh(0) == 0
    enc_ref[...] = enc.astype(enc_ref.dtype)      # full-width (unmasked) store

    # ---- decoder: (Linear + ReLU) x3, Linear ----
    y = enc.astype(jnp.bfloat16)
    for i in range(4, 7):
        acc = jnp.dot(y, w_ref[i], preferred_element_type=jnp.float32)
        acc = jnp.maximum(acc + b_ref[i], 0.0)
        y = acc.astype(jnp.bfloat16)
    acc = jnp.dot(y, w_ref[7], preferred_element_type=jnp.float32)
    dec = acc + b_ref[7]                          # padded lanes stay exactly 0
    dec_ref[...] = dec.astype(dec_ref.dtype)      # full-width (unmasked) store


def encoder_decoder_forward(feat, weights_p, biases_p, *, batch_tile=None):
    """feat     : [B, PROCESSED_SIZE] f32.
    weights_p: bf16 [8, 128, 128] (zero-padded, [in, out] layout).
    biases_p : f32  [8, 1, 128]   (zero-padded).
    Returns (enc_x [B, COMM_LEN] f32, dec_x [B, PROCESSED_SIZE] f32)."""
    B, F = feat.shape
    assert F == PROCESSED_SIZE
    assert weights_p.shape == (N_LAYERS, PAD, PAD)
    assert biases_p.shape == (N_LAYERS, 1, PAD)

    # Large batch tiles (multiple of 16 for bf16 sublane packing); a single
    # grid step for small B, capped at 512 rows per step.
    if batch_tile is None:
        batch_tile = min(512, _round_up(B, 16))
    batch_tile = max(16, _round_up(batch_tile, 16))
    B_pad = _round_up(B, batch_tile)

    # Lane-dense bf16 input: pad features 64->128 and batch B->B_pad with zeros.
    feat_p = jnp.zeros((B_pad, PAD), jnp.bfloat16)
    feat_p = feat_p.at[:B, :F].set(feat.astype(jnp.bfloat16))

    grid = (B_pad // batch_tile,)

    in_specs = [
        pl.BlockSpec((batch_tile, PAD), lambda i: (i, 0)),          # activations
        pl.BlockSpec((N_LAYERS, PAD, PAD), lambda i: (0, 0, 0)),    # all weights
        pl.BlockSpec((N_LAYERS, 1, PAD), lambda i: (0, 0, 0)),      # all biases
    ]
    out_specs = [
        pl.BlockSpec((batch_tile, PAD), lambda i: (i, 0)),
        pl.BlockSpec((batch_tile, PAD), lambda i: (i, 0)),
    ]
    out_shape = (
        jax.ShapeDtypeStruct((B_pad, PAD), jnp.float32),
        jax.ShapeDtypeStruct((B_pad, PAD), jnp.float32),
    )

    enc_p, dec_p = pl.pallas_call(
        _encdec_kernel,
        out_shape=out_shape,
        grid_spec=pltpu.PrefetchScalarGridSpec(
            num_scalar_prefetch=0,
            grid=grid,
            in_specs=in_specs,
            out_specs=out_specs,
        ),
        compiler_params=pltpu.CompilerParams(
            dimension_semantics=("parallel",)
        ),
    )(feat_p, weights_p, biases_p)

    # Slice the valid lanes / rows back out (lane-dense padding trick).
    return enc_p[:B, :COMM_LEN], dec_p[:B, :PROCESSED_SIZE]


def init_params(key):
    """Deterministic PyTorch-default-style init: U(-1/sqrt(in), 1/sqrt(in)).
    Returns true-shaped f32 params, weights stored [in, out]."""
    weights, biases = [], []
    for (fan_in, fan_out) in ALL_DIMS:
        key, kw, kb = jax.random.split(key, 3)
        bound = 1.0 / np.sqrt(fan_in)
        w = jax.random.uniform(kw, (fan_in, fan_out), jnp.float32, -bound, bound)
        b = jax.random.uniform(kb, (1, fan_out), jnp.float32, -bound, bound)
        weights.append(w)
        biases.append(b)
    return weights, biases


def pad_params(weights, biases):
    """Zero-pad every layer to a stacked bf16 [8,128,128] weight tensor and a
    stacked f32 [8,1,128] bias tensor."""
    w_stack = jnp.zeros((N_LAYERS, PAD, PAD), jnp.float32)
    b_stack = jnp.zeros((N_LAYERS, 1, PAD), jnp.float32)
    for i, (w, b) in enumerate(zip(weights, biases)):
        fi, fo = w.shape
        w_stack = w_stack.at[i, :fi, :fo].set(w)
        b_stack = b_stack.at[i, :, :fo].set(b)
    return w_stack.astype(jnp.bfloat16), b_stack


def reference_forward_matched(feat, weights_p, biases_p):
    """Pure-JAX reference using the exact same bf16-matmul / f32-accumulate
    scheme and padded params as the kernel."""
    B = feat.shape[0]
    x = jnp.zeros((B, PAD), jnp.bfloat16)
    x = x.at[:, :PROCESSED_SIZE].set(feat.astype(jnp.bfloat16))
    for i in range(3):
        a = jnp.dot(x, weights_p[i], preferred_element_type=jnp.float32) + biases_p[i]
        x = jnp.maximum(a, 0.0).astype(jnp.bfloat16)
    enc = jnp.tanh(jnp.dot(x, weights_p[3], preferred_element_type=jnp.float32) + biases_p[3])
    y = enc.astype(jnp.bfloat16)
    for i in range(4, 7):
        a = jnp.dot(y, weights_p[i], preferred_element_type=jnp.float32) + biases_p[i]
        y = jnp.maximum(a, 0.0).astype(jnp.bfloat16)
    dec = jnp.dot(y, weights_p[7], preferred_element_type=jnp.float32) + biases_p[7]
    return enc[:, :COMM_LEN], dec[:, :PROCESSED_SIZE]


def reference_forward_f32(feat, weights, biases):
    """Full-f32 reference (PyTorch semantics) — informational comparison only."""
    x = feat
    for i in range(3):
        x = jnp.maximum(x @ weights[i] + biases[i], 0.0)
    enc = jnp.tanh(x @ weights[3] + biases[3])
    y = enc
    for i in range(4, 7):
        y = jnp.maximum(y @ weights[i] + biases[i], 0.0)
    dec = y @ weights[7] + biases[7]
    return enc, dec


if __name__ == "__main__":
    key = jax.random.PRNGKey(0)
    key, kf = jax.random.split(key)

    weights, biases = init_params(key)
    weights_p, biases_p = pad_params(weights, biases)

    # ---- Case 1: tiny batch -> single grid step (batch_tile == B) ----
    B = 16
    feat = jax.random.normal(kf, (B, PROCESSED_SIZE), jnp.float32)

    enc_x, dec_x = encoder_decoder_forward(feat, weights_p, biases_p)
    enc_x, dec_x = jax.block_until_ready((enc_x, dec_x))
    assert enc_x.shape == (B, COMM_LEN) and dec_x.shape == (B, PROCESSED_SIZE)

    enc_m, dec_m = reference_forward_matched(feat, weights_p, biases_p)
    assert jnp.allclose(enc_x, enc_m, atol=1e-3, rtol=1e-3)
    assert jnp.allclose(dec_x, dec_m, atol=1e-3, rtol=1e-3)

    # informational: deviation of the bf16-matmul kernel from the f32 module
    enc_f, dec_f = reference_forward_f32(feat, weights, biases)
    print("max |enc - f32 ref| =", float(jnp.max(jnp.abs(enc_x - enc_f))))
    print("max |dec - f32 ref| =", float(jnp.max(jnp.abs(dec_x - dec_f))))

    # ---- Case 2: larger, non-multiple batch -> multi-step parallel grid ----
    B2 = 1000
    feat2 = jax.random.normal(jax.random.PRNGKey(1), (B2, PROCESSED_SIZE), jnp.float32)
    enc2, dec2 = encoder_decoder_forward(feat2, weights_p, biases_p, batch_tile=256)
    enc2, dec2 = jax.block_until_ready((enc2, dec2))
    assert enc2.shape == (B2, COMM_LEN) and dec2.shape == (B2, PROCESSED_SIZE)

    enc2_m, dec2_m = reference_forward_matched(feat2, weights_p, biases_p)
    assert jnp.allclose(enc2, enc2_m, atol=1e-3, rtol=1e-3)
    assert jnp.allclose(dec2, dec2_m, atol=1e-3, rtol=1e-3)

    print("KERNEL_OK")
</pallas_src>

<mosaic_0001>
module attributes {stable_mosaic.version = 11 : i64} {
  func.func @_encdec_kernel(%arg0: i32, %arg1: memref<16x128xbf16, #tpu.memory_space<vmem>>, %arg2: memref<8x128x128xbf16, #tpu.memory_space<vmem>>, %arg3: memref<8x1x128xf32, #tpu.memory_space<vmem>>, %arg4: memref<16x128xf32, #tpu.memory_space<vmem>>, %arg5: memref<16x128xf32, #tpu.memory_space<vmem>>) attributes {dimension_semantics = [#tpu.dimension_semantics<parallel>], iteration_bounds = array<i64: 1>, scalar_prefetch = 0 : i64, scratch_operands = 0 : i64, tpu.core_type = #tpu.core_type<tc>, window_params = [{transform_indices = @transform_0, window_bounds = array<i64: 16, 128>}, {pipeline_mode = #tpu.pipeline_mode<synchronous>, transform_indices = @transform_1, window_bounds = array<i64: 8, 128, 128>}, {pipeline_mode = #tpu.pipeline_mode<synchronous>, transform_indices = @transform_2, window_bounds = array<i64: 8, 1, 128>}, {transform_indices = @transform_3, window_bounds = array<i64: 16, 128>}, {transform_indices = @transform_4, window_bounds = array<i64: 16, 128>}]} {
    %c0 = arith.constant 0 : index
    %c0_0 = arith.constant 0 : index
    %0 = vector.load %arg1[%c0, %c0_0] : memref<16x128xbf16, #tpu.memory_space<vmem>>, vector<16x128xbf16>
    %c0_1 = arith.constant 0 : index
    %c0_2 = arith.constant 0 : index
    %c0_3 = arith.constant 0 : index
    %1 = vector.load %arg2[%c0_1, %c0_2, %c0_3] : memref<8x128x128xbf16, #tpu.memory_space<vmem>>, vector<1x128x128xbf16>
    %2 = vector.shape_cast %1 : vector<1x128x128xbf16> to vector<128x128xbf16>
    %cst = arith.constant dense<0.000000e+00> : vector<16x128xf32>
    %3 = tpu.matmul %0, %2, %cst {dimension_numbers = #tpu.dot_dimension_numbers<[1], [0], [0], [1], [0, 0, 1, 1], [], []>} : vector<16x128xbf16>, vector<128x128xbf16>, vector<16x128xf32> -> vector<16x128xf32>
    %c0_4 = arith.constant 0 : index
    %c0_5 = arith.constant 0 : index
    %c0_6 = arith.constant 0 : index
    %4 = vector.load %arg3[%c0_4, %c0_5, %c0_6] : memref<8x1x128xf32, #tpu.memory_space<vmem>>, vector<1x1x128xf32>
    %5 = vector.shape_cast %4 : vector<1x1x128xf32> to vector<1x128xf32>
    %6 = vector.broadcast %5 : vector<1x128xf32> to vector<16x128xf32>
    %7 = arith.addf %3, %6 : vector<16x128xf32>
    %cst_7 = arith.constant 0.000000e+00 : f32
    %8 = vector.broadcast %cst_7 : f32 to vector<16x128xf32>
    %9 = arith.maximumf %7, %8 : vector<16x128xf32>
    %10 = arith.truncf %9 : vector<16x128xf32> to vector<16x128xbf16>
    %c1 = arith.constant 1 : index
    %c0_8 = arith.constant 0 : index
    %c0_9 = arith.constant 0 : index
    %11 = vector.load %arg2[%c1, %c0_8, %c0_9] : memref<8x128x128xbf16, #tpu.memory_space<vmem>>, vector<1x128x128xbf16>
    %12 = vector.shape_cast %11 : vector<1x128x128xbf16> to vector<128x128xbf16>
    %cst_10 = arith.constant dense<0.000000e+00> : vector<16x128xf32>
    %13 = tpu.matmul %10, %12, %cst_10 {dimension_numbers = #tpu.dot_dimension_numbers<[1], [0], [0], [1], [0, 0, 1, 1], [], []>} : vector<16x128xbf16>, vector<128x128xbf16>, vector<16x128xf32> -> vector<16x128xf32>
    %c1_11 = arith.constant 1 : index
    %c0_12 = arith.constant 0 : index
    %c0_13 = arith.constant 0 : index
    %14 = vector.load %arg3[%c1_11, %c0_12, %c0_13] : memref<8x1x128xf32, #tpu.memory_space<vmem>>, vector<1x1x128xf32>
    %15 = vector.shape_cast %14 : vector<1x1x128xf32> to vector<1x128xf32>
    %16 = vector.broadcast %15 : vector<1x128xf32> to vector<16x128xf32>
    %17 = arith.addf %13, %16 : vector<16x128xf32>
    %cst_14 = arith.constant 0.000000e+00 : f32
    %18 = vector.broadcast %cst_14 : f32 to vector<16x128xf32>
    %19 = arith.maximumf %17, %18 : vector<16x128xf32>
    %20 = arith.truncf %19 : vector<16x128xf32> to vector<16x128xbf16>
    %c2 = arith.constant 2 : index
    %c0_15 = arith.constant 0 : index
    %c0_16 = arith.constant 0 : index
    %21 = vector.load %arg2[%c2, %c0_15, %c0_16] : memref<8x128x128xbf16, #tpu.memory_space<vmem>>, vector<1x128x128xbf16>
    %22 = vector.shape_cast %21 : vector<1x128x128xbf16> to vector<128x128xbf16>
    %cst_17 = arith.constant dense<0.000000e+00> : vector<16x128xf32>
    %23 = tpu.matmul %20, %22, %cst_17 {dimension_numbers = #tpu.dot_dimension_numbers<[1], [0], [0], [1], [0, 0, 1, 1], [], []>} : vector<16x128xbf16>, vector<128x128xbf16>, vector<16x128xf32> -> vector<16x128xf32>
    %c2_18 = arith.constant 2 : index
    %c0_19 = arith.constant 0 : index
    %c0_20 = arith.constant 0 : index
    %24 = vector.load %arg3[%c2_18, %c0_19, %c0_20] : memref<8x1x128xf32, #tpu.memory_space<vmem>>, vector<1x1x128xf32>
    %25 = vector.shape_cast %24 : vector<1x1x128xf32> to vector<1x128xf32>
    %26 = vector.broadcast %25 : vector<1x128xf32> to vector<16x128xf32>
    %27 = arith.addf %23, %26 : vector<16x128xf32>
    %cst_21 = arith.constant 0.000000e+00 : f32
    %28 = vector.broadcast %cst_21 : f32 to vector<16x128xf32>
    %29 = arith.maximumf %27, %28 : vector<16x128xf32>
    %30 = arith.truncf %29 : vector<16x128xf32> to vector<16x128xbf16>
    %c3 = arith.constant 3 : index
    %c0_22 = arith.constant 0 : index
    %c0_23 = arith.constant 0 : index
    %31 = vector.load %arg2[%c3, %c0_22, %c0_23] : memref<8x128x128xbf16, #tpu.memory_space<vmem>>, vector<1x128x128xbf16>
    %32 = vector.shape_cast %31 : vector<1x128x128xbf16> to vector<128x128xbf16>
    %cst_24 = arith.constant dense<0.000000e+00> : vector<16x128xf32>
    %33 = tpu.matmul %30, %32, %cst_24 {dimension_numbers = #tpu.dot_dimension_numbers<[1], [0], [0], [1], [0, 0, 1, 1], [], []>} : vector<16x128xbf16>, vector<128x128xbf16>, vector<16x128xf32> -> vector<16x128xf32>
    %c3_25 = arith.constant 3 : index
    %c0_26 = arith.constant 0 : index
    %c0_27 = arith.constant 0 : index
    %34 = vector.load %arg3[%c3_25, %c0_26, %c0_27] : memref<8x1x128xf32, #tpu.memory_space<vmem>>, vector<1x1x128xf32>
    %35 = vector.shape_cast %34 : vector<1x1x128xf32> to vector<1x128xf32>
    %36 = vector.broadcast %35 : vector<1x128xf32> to vector<16x128xf32>
    %37 = arith.addf %33, %36 : vector<16x128xf32>
    %38 = math.tanh %37 : vector<16x128xf32>
    %c0_28 = arith.constant 0 : index
    %c0_29 = arith.constant 0 : index
    %39 = vector.load %arg4[%c0_28, %c0_29] : memref<16x128xf32, #tpu.memory_space<vmem>>, vector<16x128xf32>
    tpu.vector_store %arg4[%c0_28, %c0_29], %38 {strides = array<i32>} : memref<16x128xf32, #tpu.memory_space<vmem>>, vector<16x128xf32>,
    %40 = arith.truncf %38 : vector<16x128xf32> to vector<16x128xbf16>
    %c4 = arith.constant 4 : index
    %c0_30 = arith.constant 0 : index
    %c0_31 = arith.constant 0 : index
    %41 = vector.load %arg2[%c4, %c0_30, %c0_31] : memref<8x128x128xbf16, #tpu.memory_space<vmem>>, vector<1x128x128xbf16>
    %42 = vector.shape_cast %41 : vector<1x128x128xbf16> to vector<128x128xbf16>
    %cst_32 = arith.constant dense<0.000000e+00> : vector<16x128xf32>
    %43 = tpu.matmul %40, %42, %cst_32 {dimension_numbers = #tpu.dot_dimension_numbers<[1], [0], [0], [1], [0, 0, 1, 1], [], []>} : vector<16x128xbf16>, vector<128x128xbf16>, vector<16x128xf32> -> vector<16x128xf32>
    %c4_33 = arith.constant 4 : index
    %c0_34 = arith.constant 0 : index
    %c0_35 = arith.constant 0 : index
    %44 = vector.load %arg3[%c4_33, %c0_34, %c0_35] : memref<8x1x128xf32, #tpu.memory_space<vmem>>, vector<1x1x128xf32>
    %45 = vector.shape_cast %44 : vector<1x1x128xf32> to vector<1x128xf32>
    %46 = vector.broadcast %45 : vector<1x128xf32> to vector<16x128xf32>
    %47 = arith.addf %43, %46 : vector<16x128xf32>
    %cst_36 = arith.constant 0.000000e+00 : f32
    %48 = vector.broadcast %cst_36 : f32 to vector<16x128xf32>
    %49 = arith.maximumf %47, %48 : vector<16x128xf32>
    %50 = arith.truncf %49 : vector<16x128xf32> to vector<16x128xbf16>
    %c5 = arith.constant 5 : index
    %c0_37 = arith.constant 0 : index
    %c0_38 = arith.constant 0 : index
    %51 = vector.load %arg2[%c5, %c0_37, %c0_38] : memref<8x128x128xbf16, #tpu.memory_space<vmem>>, vector<1x128x128xbf16>
    %52 = vector.shape_cast %51 : vector<1x128x128xbf16> to vector<128x128xbf16>
    %cst_39 = arith.constant dense<0.000000e+00> : vector<16x128xf32>
    %53 = tpu.matmul %50, %52, %cst_39 {dimension_numbers = #tpu.dot_dimension_numbers<[1], [0], [0], [1], [0, 0, 1, 1], [], []>} : vector<16x128xbf16>, vector<128x128xbf16>, vector<16x128xf32> -> vector<16x128xf32>
    %c5_40 = arith.constant 5 : index
    %c0_41 = arith.constant 0 : index
    %c0_42 = arith.constant 0 : index
    %54 = vector.load %arg3[%c5_40, %c0_41, %c0_42] : memref<8x1x128xf32, #tpu.memory_space<vmem>>, vector<1x1x128xf32>
    %55 = vector.shape_cast %54 : vector<1x1x128xf32> to vector<1x128xf32>
    %56 = vector.broadcast %55 : vector<1x128xf32> to vector<16x128xf32>
    %57 = arith.addf %53, %56 : vector<16x128xf32>
    %cst_43 = arith.constant 0.000000e+00 : f32
    %58 = vector.broadcast %cst_43 : f32 to vector<16x128xf32>
    %59 = arith.maximumf %57, %58 : vector<16x128xf32>
    %60 = arith.truncf %59 : vector<16x128xf32> to vector<16x128xbf16>
    %c6 = arith.constant 6 : index
    %c0_44 = arith.constant 0 : index
    %c0_45 = arith.constant 0 : index
    %61 = vector.load %arg2[%c6, %c0_44, %c0_45] : memref<8x128x128xbf16, #tpu.memory_space<vmem>>, vector<1x128x128xbf16>
    %62 = vector.shape_cast %61 : vector<1x128x128xbf16> to vector<128x128xbf16>
    %cst_46 = arith.constant dense<0.000000e+00> : vector<16x128xf32>
    %63 = tpu.matmul %60, %62, %cst_46 {dimension_numbers = #tpu.dot_dimension_numbers<[1], [0], [0], [1], [0, 0, 1, 1], [], []>} : vector<16x128xbf16>, vector<128x128xbf16>, vector<16x128xf32> -> vector<16x128xf32>
    %c6_47 = arith.constant 6 : index
    %c0_48 = arith.constant 0 : index
    %c0_49 = arith.constant 0 : index
    %64 = vector.load %arg3[%c6_47, %c0_48, %c0_49] : memref<8x1x128xf32, #tpu.memory_space<vmem>>, vector<1x1x128xf32>
    %65 = vector.shape_cast %64 : vector<1x1x128xf32> to vector<1x128xf32>
    %66 = vector.broadcast %65 : vector<1x128xf32> to vector<16x128xf32>
    %67 = arith.addf %63, %66 : vector<16x128xf32>
    %cst_50 = arith.constant 0.000000e+00 : f32
    %68 = vector.broadcast %cst_50 : f32 to vector<16x128xf32>
    %69 = arith.maximumf %67, %68 : vector<16x128xf32>
    %70 = arith.truncf %69 : vector<16x128xf32> to vector<16x128xbf16>
    %c7 = arith.constant 7 : index
    %c0_51 = arith.constant 0 : index
    %c0_52 = arith.constant 0 : index
    %71 = vector.load %arg2[%c7, %c0_51, %c0_52] : memref<8x128x128xbf16, #tpu.memory_space<vmem>>, vector<1x128x128xbf16>
    %72 = vector.shape_cast %71 : vector<1x128x128xbf16> to vector<128x128xbf16>
    %cst_53 = arith.constant dense<0.000000e+00> : vector<16x128xf32>
    %73 = tpu.matmul %70, %72, %cst_53 {dimension_numbers = #tpu.dot_dimension_numbers<[1], [0], [0], [1], [0, 0, 1, 1], [], []>} : vector<16x128xbf16>, vector<128x128xbf16>, vector<16x128xf32> -> vector<16x128xf32>
    %c7_54 = arith.constant 7 : index
    %c0_55 = arith.constant 0 : index
    %c0_56 = arith.constant 0 : index
    %74 = vector.load %arg3[%c7_54, %c0_55, %c0_56] : memref<8x1x128xf32, #tpu.memory_space<vmem>>, vector<1x1x128xf32>
    %75 = vector.shape_cast %74 : vector<1x1x128xf32> to vector<1x128xf32>
    %76 = vector.broadcast %75 : vector<1x128xf32> to vector<16x128xf32>
    %77 = arith.addf %73, %76 : vector<16x128xf32>
    %c0_57 = arith.constant 0 : index
    %c0_58 = arith.constant 0 : index
    %78 = vector.load %arg5[%c0_57, %c0_58] : memref<16x128xf32, #tpu.memory_space<vmem>>, vector<16x128xf32>
    tpu.vector_store %arg5[%c0_57, %c0_58], %77 {strides = array<i32>} : memref<16x128xf32, #tpu.memory_space<vmem>>, vector<16x128xf32>,
    return
  }
  func.func @transform_0(%arg0: i32) -> (i32, i32) {
    %c0_i32 = arith.constant 0 : i32
    %c0_i32_0 = arith.constant 0 : i32
    return %arg0, %c0_i32 : i32, i32
  }
  func.func @transform_1(%arg0: i32) -> (i32, i32, i32) {
    %c0_i32 = arith.constant 0 : i32
    %c0_i32_0 = arith.constant 0 : i32
    %c0_i32_1 = arith.constant 0 : i32
    %c0_i32_2 = arith.constant 0 : i32
    return %c0_i32, %c0_i32_0, %c0_i32_1 : i32, i32, i32
  }
  func.func @transform_2(%arg0: i32) -> (i32, i32, i32) {
    %c0_i32 = arith.constant 0 : i32
    %c0_i32_0 = arith.constant 0 : i32
    %c0_i32_1 = arith.constant 0 : i32
    %c0_i32_2 = arith.constant 0 : i32
    return %c0_i32, %c0_i32_0, %c0_i32_1 : i32, i32, i32
  }
  func.func @transform_3(%arg0: i32) -> (i32, i32) {
    %c0_i32 = arith.constant 0 : i32
    %c0_i32_0 = arith.constant 0 : i32
    return %arg0, %c0_i32 : i32, i32
  }
  func.func @transform_4(%arg0: i32) -> (i32, i32) {
    %c0_i32 = arith.constant 0 : i32
    %c0_i32_0 = arith.constant 0 : i32
    return %arg0, %c0_i32 : i32, i32
  }
}

</mosaic_0001>

<llo_original>
// kernel: tpu_custom_call.1
$region0: #{tpu_custom_call.1}
  #allocation0 [shape = 'u32[]', space=smem, size = 0x4, offset = 0x4, fixed_abs, tag = 'smem constant byte address 0x4 - core index']
  #allocation1 [shape = 'u32[144,128]{1,0:T(1,128)}', space=vmem, size = 0x12000, scoped, tag = 'internal scratch']
  %s0 = inlined_call_operand.hbm [shape: bf16[16,128], index: 0, kind: input, shape index: {}]
  %s1 = inlined_call_operand.hbm [shape: bf16[8,128,128], index: 1, kind: input, shape index: {}]
  %s2 = inlined_call_operand.hbm [shape: f32[8,1,128], index: 2, kind: input, shape index: {}]
  %s3 = inlined_call_operand.hbm [shape: f32[16,128], index: 3, kind: output, shape index: {0}]
  %s4 = inlined_call_operand.hbm [shape: f32[16,128], index: 4, kind: output, shape index: {1}]
  %5 = xla_tuple %s3, %s4
  %s6 = sld [smem:[#allocation0]]
  $region42: #{tpu_custom_call.1} parent=0
    _
  %s8 = ssub.s32 1, %s6
  %s9 = scalar_select 0, %s8, %s6
  $region1: #{tpu_custom_call.1} parent=0
    #allocation2 [shape = 'u8[4096]{0}', space=vmem, size = 0x1000, scoped, tag = 'input window, operand 0, single buffered']
    #allocation3 [shape = 's32[1]{0}', space=sflag, size = 0x4, scoped, tag = 'scoped memory for tpu_custom_call.1']
    #allocation4 [shape = 's32[1]{0}', space=sflag, size = 0x4, scoped, tag = 'scoped memory for tpu_custom_call.1']
    #allocation5 [shape = 'u8[262144]{0}', space=vmem, size = 0x40000, scoped, tag = 'input window, operand 1, single buffered']
    #allocation6 [shape = 's32[1]{0}', space=sflag, size = 0x4, scoped, tag = 'scoped memory for tpu_custom_call.1']
    #allocation7 [shape = 'u8[4096]{0}', space=vmem, size = 0x1000, scoped, tag = 'input window, operand 2, single buffered']
    #allocation8 [shape = 'u8[8192]{0}', space=vmem, size = 0x2000, scoped, tag = 'output window, operand 0, single buffered']
    #allocation9 [shape = 'u8[8192]{0}', space=vmem, size = 0x2000, scoped, tag = 'output window, operand 1, single buffered']
    #allocation10 [shape = 's32[1]{0}', space=sflag, size = 0x4, scoped, tag = 'scoped memory for tpu_custom_call.1']
    %10 = vsyncpa [#allocation3], 0
    %11 = vsyncpa [#allocation6], 0
    %12 = vsyncpa [#allocation4], 0
    %13 = vsyncpa [#allocation10], 0
    // Predicated region
    $region2: #{tpu_custom_call.1} parent=1 // pred_check
      _
    $region3: #{tpu_custom_call.1} parent=1 // pred_check_branch
      %15 = sbr.rel (0) target = $region5
    $region4: #{tpu_custom_call.1} parent=1 // pred_region
      %s17 = ssub.s32 128, 128
      %18 = vsyncadd [#allocation3], %s17
      %s19 = sshll.u32 [#allocation2], 4
      %s20 = int_to_ptr.vmem [resolvable:$true] %s19
      %25 = dma.hbm_to_vmem [thread:$0]  %s0, 128, %s20, [#allocation3], 64, 64, 4
    $region5: #{tpu_custom_call.1} parent=1 // pred_fallthru
      _
    // Predicated region
    $region6: #{tpu_custom_call.1} parent=1 // pred_check
      _
    $region7: #{tpu_custom_call.1} parent=1 // pred_check_branch
      %27 = sbr.rel (0) target = $region9
    $region8: #{tpu_custom_call.1} parent=1 // pred_region
      %s29 = ssub.s32 8192, 8192
      %30 = vsyncadd [#allocation6], %s29
      %s31 = sshll.u32 [#allocation5], 4
      %s32 = int_to_ptr.vmem [resolvable:$true] %s31
      %37 = dma.hbm_to_vmem [thread:$0]  %s1, 8192, %s32, [#allocation6], 64, 64, 4
    $region9: #{tpu_custom_call.1} parent=1 // pred_fallthru
      _
    // Predicated region
    $region10: #{tpu_custom_call.1} parent=1 // pred_check
      _
    $region11: #{tpu_custom_call.1} parent=1 // pred_check_branch
      %39 = sbr.rel (0) target = $region13
    $region12: #{tpu_custom_call.1} parent=1 // pred_region
      %s41 = ssub.s32 128, 128
      %42 = vsyncadd [#allocation6], %s41
      %s43 = sshll.u32 [#allocation7], 4
      %s44 = int_to_ptr.vmem [resolvable:$true] %s43
      %49 = dma.hbm_to_vmem [thread:$0]  %s2, 128, %s44, [#allocation6], 16, 16, 1
    $region13: #{tpu_custom_call.1} parent=1 // pred_fallthru
      _
    // Predicated region
    $region14: #{tpu_custom_call.1} parent=1 // pred_check
      _
    $region15: #{tpu_custom_call.1} parent=1 // pred_check_branch
      %51 = sbr.rel (0) target = $region17
    $region16: #{tpu_custom_call.1} parent=1 // pred_region
      %52 = dma.done [#allocation3], 128
    $region17: #{tpu_custom_call.1} parent=1 // pred_fallthru
      _
    // Predicated region
    $region18: #{tpu_custom_call.1} parent=1 // pred_check
      _
    $region19: #{tpu_custom_call.1} parent=1 // pred_check_branch
      %54 = sbr.rel (0) target = $region21
    $region20: #{tpu_custom_call.1} parent=1 // pred_region
      %55 = dma.done [#allocation6], 8192
    $region21: #{tpu_custom_call.1} parent=1 // pred_fallthru
      _
    // Predicated region
    $region22: #{tpu_custom_call.1} parent=1 // pred_check
      _
    $region23: #{tpu_custom_call.1} parent=1 // pred_check_branch
      %57 = sbr.rel (0) target = $region25
    $region24: #{tpu_custom_call.1} parent=1 // pred_region
      %58 = dma.done [#allocation6], 128
    $region25: #{tpu_custom_call.1} parent=1 // pred_fallthru
      _
    %v60 = vld [vmem:[#allocation2] sm:$0xf]
    %v61 = vld [vmem:[#allocation2 + $0x4] sm:$0xf]
    %v62 = vld [vmem:[#allocation5] sm:$0xf]
    %v63 = vld [vmem:[#allocation5 + $0x4] sm:$0xf]
    %v64 = vld [vmem:[#allocation5 + $0x8] sm:$0xf]
    %v65 = vld [vmem:[#allocation5 + $0xc] sm:$0xf]
    %v66 = vld [vmem:[#allocation5 + $0x10] sm:$0xf]
    %v67 = vld [vmem:[#allocation5 + $0x14] sm:$0xf]
    %v68 = vld [vmem:[#allocation5 + $0x18] sm:$0xf]
    %v69 = vld [vmem:[#allocation5 + $0x1c] sm:$0xf]
    %v70 = vld [vmem:[#allocation5 + $0x20] sm:$0xf]
    %v71 = vld [vmem:[#allocation5 + $0x24] sm:$0xf]
    %v72 = vld [vmem:[#allocation5 + $0x28] sm:$0xf]
    %v73 = vld [vmem:[#allocation5 + $0x2c] sm:$0xf]
    %v74 = vld [vmem:[#allocation5 + $0x30] sm:$0xf]
    %v75 = vld [vmem:[#allocation5 + $0x34] sm:$0xf]
    %v76 = vld [vmem:[#allocation5 + $0x38] sm:$0xf]
    %v77 = vld [vmem:[#allocation5 + $0x3c] sm:$0xf]
    %v78 = vld [vmem:[#allocation7] sm:$0x1]
    %v80 = vlaneseq
    %v81 = vshrl.u32 %v80, 7
    %v82 = vsub.s32 0, %v81
    %v83 = vrot.slane %v78, %v82
    %v87 = vunpack.c.l.b16 %v60
    %v88 = vunpack.c.l.b16 %v61
    %v89 = vpack.c.b16 %v88, %v87
    %v107 = vunpack.c.l.b16 %v62
    %v108 = vunpack.c.l.b16 %v63
    %v109 = vunpack.c.l.b16 %v64
    %v110 = vunpack.c.l.b16 %v65
    %v111 = vunpack.c.l.b16 %v66
    %v112 = vunpack.c.l.b16 %v67
    %v113 = vunpack.c.l.b16 %v68
    %v114 = vunpack.c.l.b16 %v69
    %v115 = vunpack.c.l.b16 %v70
    %v116 = vunpack.c.l.b16 %v71
    %v117 = vunpack.c.l.b16 %v72
    %v118 = vunpack.c.l.b16 %v73
    %v119 = vunpack.c.l.b16 %v74
    %v120 = vunpack.c.l.b16 %v75
    %v121 = vunpack.c.l.b16 %v76
    %v122 = vunpack.c.l.b16 %v77
    %v123 = vpack.c.b16 %v108, %v107
    %v124 = vpack.c.b16 %v110, %v109
    %v125 = vpack.c.b16 %v112, %v111
    %v126 = vpack.c.b16 %v114, %v113
    %v127 = vpack.c.b16 %v116, %v115
    %v128 = vpack.c.b16 %v118, %v117
    %v129 = vpack.c.b16 %v120, %v119
    %v130 = vpack.c.b16 %v122, %v121
    %139 = vmatprep.subr.bf16.mxu0 0
    %140 = vmatpush1.bf16.msra.mxu0 %v123
    %141 = vmatprep.subr.bf16.mxu0 0
    %142 = vmatpush1.bf16.msra.mxu0 %v124
    %143 = vmatprep.subr.bf16.mxu0 0
    %144 = vmatpush1.bf16.msra.mxu0 %v125
    %145 = vmatprep.subr.bf16.mxu0 0
    %146 = vmatpush1.bf16.msra.mxu0 %v126
    %147 = vmatprep.subr.bf16.mxu0 0
    %148 = vmatpush1.bf16.msra.mxu0 %v127
    %149 = vmatprep.subr.bf16.mxu0 0
    %150 = vmatpush1.bf16.msra.mxu0 %v128
    %151 = vmatprep.subr.bf16.mxu0 0
    %152 = vmatpush1.bf16.msra.mxu0 %v129
    %153 = vmatprep.subr.bf16.mxu0 0
    %154 = vmatpush1.bf16.msra.mxu0 %v130
    %155 = vmatprep.subr.bf16.mxu0 0
    %156 = vmatpush1.bf16.msra.mxu0 0
    %157 = vmatprep.subr.bf16.mxu0 0
    %158 = vmatpush1.bf16.msra.mxu0 0
    %159 = vmatprep.subr.bf16.mxu0 0
    %160 = vmatpush1.bf16.msra.mxu0 0
    %161 = vmatprep.subr.bf16.mxu0 0
    %162 = vmatpush1.bf16.msra.mxu0 0
    %163 = vmatprep.subr.bf16.mxu0 0
    %164 = vmatpush1.bf16.msra.mxu0 0
    %165 = vmatprep.subr.bf16.mxu0 0
    %166 = vmatpush1.bf16.msra.mxu0 0
    %167 = vmatprep.subr.bf16.mxu0 0
    %168 = vmatpush1.bf16.msra.mxu0 0
    %169 = vmatprep.subr.bf16.mxu0 0
    %170 = vmatpush1.bf16.msra.mxu0 0
    %171 = vmatprep.mubr.bf16.mxu0 0
    %172 = vmatmul.mubr.bf16.gmra.mrb[0].mxu0 %v89
    %v173 = vpop.f32.mrb[0].mxu0
    %v174 = vadd.f32 %v83, %v173
    %v175 = vpop.f32.mrb[0].mxu0
    %v176 = vpop.f32.mrb[0].mxu0
    %v177 = vadd.f32 %v83, %v176
    %v178 = vpop.f32.mrb[0].mxu0
    %179 = vdwg.mxu0
    %v180 = vmax.f32 %v174, 0.0
    %v181 = vmax.f32 %v177, 0.0
    %v182 = vpack.c.bf16 %v181, %v180
    %s183 = scalar_lea.vmem [#allocation5], 64
    %v184 = vld [vmem:[%s183] sm:$0xf]
    %v185 = vld [vmem:[%s183 + $0x4] sm:$0xf]
    %v186 = vld [vmem:[%s183 + $0x8] sm:$0xf]
    %v187 = vld [vmem:[%s183 + $0xc] sm:$0xf]
    %v188 = vld [vmem:[%s183 + $0x10] sm:$0xf]
    %v189 = vld [vmem:[%s183 + $0x14] sm:$0xf]
    %v190 = vld [vmem:[%s183 + $0x18] sm:$0xf]
    %v191 = vld [vmem:[%s183 + $0x1c] sm:$0xf]
    %v192 = vld [vmem:[%s183 + $0x20] sm:$0xf]
    %v193 = vld [vmem:[%s183 + $0x24] sm:$0xf]
    %v194 = vld [vmem:[%s183 + $0x28] sm:$0xf]
    %v195 = vld [vmem:[%s183 + $0x2c] sm:$0xf]
    %v196 = vld [vmem:[%s183 + $0x30] sm:$0xf]
    %v197 = vld [vmem:[%s183 + $0x34] sm:$0xf]
    %v198 = vld [vmem:[%s183 + $0x38] sm:$0xf]
    %v199 = vld [vmem:[%s183 + $0x3c] sm:$0xf]
    %s200 = scalar_lea.vmem [#allocation7], 1
    %v201 = vld [vmem:[%s200] sm:$0x1]
    %v203 = vlaneseq
    %v204 = vshrl.u32 %v203, 7
    %v205 = vsub.s32 0, %v204
    %v206 = vrot.slane %v201, %v205
    %v224 = vunpack.c.l.b16 %v184
    %v225 = vunpack.c.l.b16 %v185
    %v226 = vunpack.c.l.b16 %v186
    %v227 = vunpack.c.l.b16 %v187
    %v228 = vunpack.c.l.b16 %v188
    %v229 = vunpack.c.l.b16 %v189
    %v230 = vunpack.c.l.b16 %v190
    %v231 = vunpack.c.l.b16 %v191
    %v232 = vunpack.c.l.b16 %v192
    %v233 = vunpack.c.l.b16 %v193
    %v234 = vunpack.c.l.b16 %v194
    %v235 = vunpack.c.l.b16 %v195
    %v236 = vunpack.c.l.b16 %v196
    %v237 = vunpack.c.l.b16 %v197
    %v238 = vunpack.c.l.b16 %v198
    %v239 = vunpack.c.l.b16 %v199
    %v240 = vpack.c.b16 %v225, %v224
    %v241 = vpack.c.b16 %v227, %v226
    %v242 = vpack.c.b16 %v229, %v228
    %v243 = vpack.c.b16 %v231, %v230
    %v244 = vpack.c.b16 %v233, %v232
    %v245 = vpack.c.b16 %v235, %v234
    %v246 = vpack.c.b16 %v237, %v236
    %v247 = vpack.c.b16 %v239, %v238
    %256 = vmatprep.subr.bf16.mxu0 0
    %257 = vmatpush1.bf16.msra.mxu0 %v240
    %258 = vmatprep.subr.bf16.mxu0 0
    %259 = vmatpush1.bf16.msra.mxu0 %v241
    %260 = vmatprep.subr.bf16.mxu0 0
    %261 = vmatpush1.bf16.msra.mxu0 %v242
    %262 = vmatprep.subr.bf16.mxu0 0
    %263 = vmatpush1.bf16.msra.mxu0 %v243
    %264 = vmatprep.subr.bf16.mxu0 0
    %265 = vmatpush1.bf16.msra.mxu0 %v244
    %266 = vmatprep.subr.bf16.mxu0 0
    %267 = vmatpush1.bf16.msra.mxu0 %v245
    %268 = vmatprep.subr.bf16.mxu0 0
    %269 = vmatpush1.bf16.msra.mxu0 %v246
    %270 = vmatprep.subr.bf16.mxu0 0
    %271 = vmatpush1.bf16.msra.mxu0 %v247
    %272 = vmatprep.subr.bf16.mxu0 0
    %273 = vmatpush1.bf16.msra.mxu0 0
    %274 = vmatprep.subr.bf16.mxu0 0
    %275 = vmatpush1.bf16.msra.mxu0 0
    %276 = vmatprep.subr.bf16.mxu0 0
    %277 = vmatpush1.bf16.msra.mxu0 0
    %278 = vmatprep.subr.bf16.mxu0 0
    %279 = vmatpush1.bf16.msra.mxu0 0
    %280 = vmatprep.subr.bf16.mxu0 0
    %281 = vmatpush1.bf16.msra.mxu0 0
    %282 = vmatprep.subr.bf16.mxu0 0
    %283 = vmatpush1.bf16.msra.mxu0 0
    %284 = vmatprep.subr.bf16.mxu0 0
    %285 = vmatpush1.bf16.msra.mxu0 0
    %286 = vmatprep.subr.bf16.mxu0 0
    %287 = vmatpush1.bf16.msra.mxu0 0
    %288 = vmatprep.mubr.bf16.mxu0 0
    %289 = vmatmul.mubr.bf16.gmra.mrb[0].mxu0 %v182
    %v290 = vpop.f32.mrb[0].mxu0
    %v291 = vadd.f32 %v206, %v290
    %v292 = vpop.f32.mrb[0].mxu0
    %v293 = vpop.f32.mrb[0].mxu0
    %v294 = vadd.f32 %v206, %v293
    %v295 = vpop.f32.mrb[0].mxu0
    %296 = vdwg.mxu0
    %v297 = vmax.f32 %v291, 0.0
    %v298 = vmax.f32 %v294, 0.0
    %v299 = vpack.c.bf16 %v298, %v297
    %s300 = scalar_lea.vmem [#allocation5], 128
    %v301 = vld [vmem:[%s300] sm:$0xf]
    %v302 = vld [vmem:[%s300 + $0x4] sm:$0xf]
    %v303 = vld [vmem:[%s300 + $0x8] sm:$0xf]
    %v304 = vld [vmem:[%s300 + $0xc] sm:$0xf]
    %v305 = vld [vmem:[%s300 + $0x10] sm:$0xf]
    %v306 = vld [vmem:[%s300 + $0x14] sm:$0xf]
    %v307 = vld [vmem:[%s300 + $0x18] sm:$0xf]
    %v308 = vld [vmem:[%s300 + $0x1c] sm:$0xf]
    %v309 = vld [vmem:[%s300 + $0x20] sm:$0xf]
    %v310 = vld [vmem:[%s300 + $0x24] sm:$0xf]
    %v311 = vld [vmem:[%s300 + $0x28] sm:$0xf]
    %v312 = vld [vmem:[%s300 + $0x2c] sm:$0xf]
    %v313 = vld [vmem:[%s300 + $0x30] sm:$0xf]
    %v314 = vld [vmem:[%s300 + $0x34] sm:$0xf]
    %v315 = vld [vmem:[%s300 + $0x38] sm:$0xf]
    %v316 = vld [vmem:[%s300 + $0x3c] sm:$0xf]
    %s317 = scalar_lea.vmem [#allocation7], 2
    %v318 = vld [vmem:[%s317] sm:$0x1]
    %v320 = vlaneseq
    %v321 = vshrl.u32 %v320, 7
    %v322 = vsub.s32 0, %v321
    %v323 = vrot.slane %v318, %v322
    %v341 = vunpack.c.l.b16 %v301
    %v342 = vunpack.c.l.b16 %v302
    %v343 = vunpack.c.l.b16 %v303
    %v344 = vunpack.c.l.b16 %v304
    %v345 = vunpack.c.l.b16 %v305
    %v346 = vunpack.c.l.b16 %v306
    %v347 = vunpack.c.l.b16 %v307
    %v348 = vunpack.c.l.b16 %v308
    %v349 = vunpack.c.l.b16 %v309
    %v350 = vunpack.c.l.b16 %v310
    %v351 = vunpack.c.l.b16 %v311
    %v352 = vunpack.c.l.b16 %v312
    %v353 = vunpack.c.l.b16 %v313
    %v354 = vunpack.c.l.b16 %v314
    %v355 = vunpack.c.l.b16 %v315
    %v356 = vunpack.c.l.b16 %v316
    %v357 = vpack.c.b16 %v342, %v341
    %v358 = vpack.c.b16 %v344, %v343
    %v359 = vpack.c.b16 %v346, %v345
    %v360 = vpack.c.b16 %v348, %v347
    %v361 = vpack.c.b16 %v350, %v349
    %v362 = vpack.c.b16 %v352, %v351
    %v363 = vpack.c.b16 %v354, %v353
    %v364 = vpack.c.b16 %v356, %v355
    %373 = vmatprep.subr.bf16.mxu0 0
    %374 = vmatpush1.bf16.msra.mxu0 %v357
    %375 = vmatprep.subr.bf16.mxu0 0
    %376 = vmatpush1.bf16.msra.mxu0 %v358
    %377 = vmatprep.subr.bf16.mxu0 0
    %378 = vmatpush1.bf16.msra.mxu0 %v359
    %379 = vmatprep.subr.bf16.mxu0 0
    %380 = vmatpush1.bf16.msra.mxu0 %v360
    %381 = vmatprep.subr.bf16.mxu0 0
    %382 = vmatpush1.bf16.msra.mxu0 %v361
    %383 = vmatprep.subr.bf16.mxu0 0
    %384 = vmatpush1.bf16.msra.mxu0 %v362
    %385 = vmatprep.subr.bf16.mxu0 0
    %386 = vmatpush1.bf16.msra.mxu0 %v363
    %387 = vmatprep.subr.bf16.mxu0 0
    %388 = vmatpush1.bf16.msra.mxu0 %v364
    %389 = vmatprep.subr.bf16.mxu0 0
    %390 = vmatpush1.bf16.msra.mxu0 0
    %391 = vmatprep.subr.bf16.mxu0 0
    %392 = vmatpush1.bf16.msra.mxu0 0
    %393 = vmatprep.subr.bf16.mxu0 0
    %394 = vmatpush1.bf16.msra.mxu0 0
    %395 = vmatprep.subr.bf16.mxu0 0
    %396 = vmatpush1.bf16.msra.mxu0 0
    %397 = vmatprep.subr.bf16.mxu0 0
    %398 = vmatpush1.bf16.msra.mxu0 0
    %399 = vmatprep.subr.bf16.mxu0 0
    %400 = vmatpush1.bf16.msra.mxu0 0
    %401 = vmatprep.subr.bf16.mxu0 0
    %402 = vmatpush1.bf16.msra.mxu0 0
    %403 = vmatprep.subr.bf16.mxu0 0
    %404 = vmatpush1.bf16.msra.mxu0 0
    %405 = vmatprep.mubr.bf16.mxu0 0
    %406 = vmatmul.mubr.bf16.gmra.mrb[0].mxu0 %v299
    %v407 = vpop.f32.mrb[0].mxu0
    %v408 = vadd.f32 %v323, %v407
    %v409 = vpop.f32.mrb[0].mxu0
    %v410 = vpop.f32.mrb[0].mxu0
    %v411 = vadd.f32 %v323, %v410
    %v412 = vpop.f32.mrb[0].mxu0
    %413 = vdwg.mxu0
    %v414 = vmax.f32 %v408, 0.0
    %v415 = vmax.f32 %v411, 0.0
    %v416 = vpack.c.bf16 %v415, %v414
    %s417 = scalar_lea.vmem [#allocation5], 192
    %v418 = vld [vmem:[%s417] sm:$0xf]
    %v419 = vld [vmem:[%s417 + $0x4] sm:$0xf]
    %v420 = vld [vmem:[%s417 + $0x8] sm:$0xf]
    %v421 = vld [vmem:[%s417 + $0xc] sm:$0xf]
    %v422 = vld [vmem:[%s417 + $0x10] sm:$0xf]
    %v423 = vld [vmem:[%s417 + $0x14] sm:$0xf]
    %v424 = vld [vmem:[%s417 + $0x18] sm:$0xf]
    %v425 = vld [vmem:[%s417 + $0x1c] sm:$0xf]
    %v426 = vld [vmem:[%s417 + $0x20] sm:$0xf]
    %v427 = vld [vmem:[%s417 + $0x24] sm:$0xf]
    %v428 = vld [vmem:[%s417 + $0x28] sm:$0xf]
    %v429 = vld [vmem:[%s417 + $0x2c] sm:$0xf]
    %v430 = vld [vmem:[%s417 + $0x30] sm:$0xf]
    %v431 = vld [vmem:[%s417 + $0x34] sm:$0xf]
    %v432 = vld [vmem:[%s417 + $0x38] sm:$0xf]
    %v433 = vld [vmem:[%s417 + $0x3c] sm:$0xf]
    %s434 = scalar_lea.vmem [#allocation7], 3
    %v435 = vld [vmem:[%s434] sm:$0x1]
    %v437 = vlaneseq
    %v438 = vshrl.u32 %v437, 7
    %v439 = vsub.s32 0, %v438
    %v440 = vrot.slane %v435, %v439
    %v458 = vunpack.c.l.b16 %v418
    %v459 = vunpack.c.l.b16 %v419
    %v460 = vunpack.c.l.b16 %v420
    %v461 = vunpack.c.l.b16 %v421
    %v462 = vunpack.c.l.b16 %v422
    %v463 = vunpack.c.l.b16 %v423
    %v464 = vunpack.c.l.b16 %v424
    %v465 = vunpack.c.l.b16 %v425
    %v466 = vunpack.c.l.b16 %v426
    %v467 = vunpack.c.l.b16 %v427
    %v468 = vunpack.c.l.b16 %v428
    %v469 = vunpack.c.l.b16 %v429
    %v470 = vunpack.c.l.b16 %v430
    %v471 = vunpack.c.l.b16 %v431
    %v472 = vunpack.c.l.b16 %v432
    %v473 = vunpack.c.l.b16 %v433
    %v474 = vpack.c.b16 %v459, %v458
    %v475 = vpack.c.b16 %v461, %v460
    %v476 = vpack.c.b16 %v463, %v462
    %v477 = vpack.c.b16 %v465, %v464
    %v478 = vpack.c.b16 %v467, %v466
    %v479 = vpack.c.b16 %v469, %v468
    %v480 = vpack.c.b16 %v471, %v470
    %v481 = vpack.c.b16 %v473, %v472
    %490 = vmatprep.subr.bf16.mxu0 0
    %491 = vmatpush1.bf16.msra.mxu0 %v474
    %492 = vmatprep.subr.bf16.mxu0 0
    %493 = vmatpush1.bf16.msra.mxu0 %v475
    %494 = vmatprep.subr.bf16.mxu0 0
    %495 = vmatpush1.bf16.msra.mxu0 %v476
    %496 = vmatprep.subr.bf16.mxu0 0
    %497 = vmatpush1.bf16.msra.mxu0 %v477
    %498 = vmatprep.subr.bf16.mxu0 0
    %499 = vmatpush1.bf16.msra.mxu0 %v478
    %500 = vmatprep.subr.bf16.mxu0 0
    %501 = vmatpush1.bf16.msra.mxu0 %v479
    %502 = vmatprep.subr.bf16.mxu0 0
    %503 = vmatpush1.bf16.msra.mxu0 %v480
    %504 = vmatprep.subr.bf16.mxu0 0
    %505 = vmatpush1.bf16.msra.mxu0 %v481
    %506 = vmatprep.subr.bf16.mxu0 0
    %507 = vmatpush1.bf16.msra.mxu0 0
    %508 = vmatprep.subr.bf16.mxu0 0
    %509 = vmatpush1.bf16.msra.mxu0 0
    %510 = vmatprep.subr.bf16.mxu0 0
    %511 = vmatpush1.bf16.msra.mxu0 0
    %512 = vmatprep.subr.bf16.mxu0 0
    %513 = vmatpush1.bf16.msra.mxu0 0
    %514 = vmatprep.subr.bf16.mxu0 0
    %515 = vmatpush1.bf16.msra.mxu0 0
    %516 = vmatprep.subr.bf16.mxu0 0
    %517 = vmatpush1.bf16.msra.mxu0 0
    %518 = vmatprep.subr.bf16.mxu0 0
    %519 = vmatpush1.bf16.msra.mxu0 0
    %520 = vmatprep.subr.bf16.mxu0 0
    %521 = vmatpush1.bf16.msra.mxu0 0
    %522 = vmatprep.mubr.bf16.mxu0 0
    %523 = vmatmul.mubr.bf16.gmra.mrb[0].mxu0 %v416
    %v524 = vpop.f32.mrb[0].mxu0
    %v525 = vadd.f32 %v440, %v524
    %v526 = vpop.f32.mrb[0].mxu0
    %v527 = vpop.f32.mrb[0].mxu0
    %v528 = vadd.f32 %v440, %v527
    %v529 = vpop.f32.mrb[0].mxu0
    %530 = vdwg.mxu0
    %v531 = vtanh.pop %v525
    %v532 = vtanh.pop %v528
    %533 = vst [vmem:[#allocation8] sm:$0xff] %v531
    %534 = vst [vmem:[#allocation8 + $0x8] sm:$0xff] %v532
    %v535 = vpack.c.bf16 %v532, %v531
    %s536 = scalar_lea.vmem [#allocation5], 256
    %v537 = vld [vmem:[%s536] sm:$0xf]
    %v538 = vld [vmem:[%s536 + $0x4] sm:$0xf]
    %v539 = vld [vmem:[%s536 + $0x8] sm:$0xf]
    %v540 = vld [vmem:[%s536 + $0xc] sm:$0xf]
    %v541 = vld [vmem:[%s536 + $0x10] sm:$0xf]
    %v542 = vld [vmem:[%s536 + $0x14] sm:$0xf]
    %v543 = vld [vmem:[%s536 + $0x18] sm:$0xf]
    %v544 = vld [vmem:[%s536 + $0x1c] sm:$0xf]
    %v545 = vld [vmem:[%s536 + $0x20] sm:$0xf]
    %v546 = vld [vmem:[%s536 + $0x24] sm:$0xf]
    %v547 = vld [vmem:[%s536 + $0x28] sm:$0xf]
    %v548 = vld [vmem:[%s536 + $0x2c] sm:$0xf]
    %v549 = vld [vmem:[%s536 + $0x30] sm:$0xf]
    %v550 = vld [vmem:[%s536 + $0x34] sm:$0xf]
    %v551 = vld [vmem:[%s536 + $0x38] sm:$0xf]
    %v552 = vld [vmem:[%s536 + $0x3c] sm:$0xf]
    %s553 = scalar_lea.vmem [#allocation7], 4
    %v554 = vld [vmem:[%s553] sm:$0x1]
    %v556 = vlaneseq
    %v557 = vshrl.u32 %v556, 7
    %v558 = vsub.s32 0, %v557
    %v559 = vrot.slane %v554, %v558
    %v577 = vunpack.c.l.b16 %v537
    %v578 = vunpack.c.l.b16 %v538
    %v579 = vunpack.c.l.b16 %v539
    %v580 = vunpack.c.l.b16 %v540
    %v581 = vunpack.c.l.b16 %v541
    %v582 = vunpack.c.l.b16 %v542
    %v583 = vunpack.c.l.b16 %v543
    %v584 = vunpack.c.l.b16 %v544
    %v585 = vunpack.c.l.b16 %v545
    %v586 = vunpack.c.l.b16 %v546
    %v587 = vunpack.c.l.b16 %v547
    %v588 = vunpack.c.l.b16 %v548
    %v589 = vunpack.c.l.b16 %v549
    %v590 = vunpack.c.l.b16 %v550
    %v591 = vunpack.c.l.b16 %v551
    %v592 = vunpack.c.l.b16 %v552
    %v593 = vpack.c.b16 %v578, %v577
    %v594 = vpack.c.b16 %v580, %v579
    %v595 = vpack.c.b16 %v582, %v581
    %v596 = vpack.c.b16 %v584, %v583
    %v597 = vpack.c.b16 %v586, %v585
    %v598 = vpack.c.b16 %v588, %v587
    %v599 = vpack.c.b16 %v590, %v589
    %v600 = vpack.c.b16 %v592, %v591
    %609 = vmatprep.subr.bf16.mxu0 0
    %610 = vmatpush1.bf16.msra.mxu0 %v593
    %611 = vmatprep.subr.bf16.mxu0 0
    %612 = vmatpush1.bf16.msra.mxu0 %v594
    %613 = vmatprep.subr.bf16.mxu0 0
    %614 = vmatpush1.bf16.msra.mxu0 %v595
    %615 = vmatprep.subr.bf16.mxu0 0
    %616 = vmatpush1.bf16.msra.mxu0 %v596
    %617 = vmatprep.subr.bf16.mxu0 0
    %618 = vmatpush1.bf16.msra.mxu0 %v597
    %619 = vmatprep.subr.bf16.mxu0 0
    %620 = vmatpush1.bf16.msra.mxu0 %v598
    %621 = vmatprep.subr.bf16.mxu0 0
    %622 = vmatpush1.bf16.msra.mxu0 %v599
    %623 = vmatprep.subr.bf16.mxu0 0
    %624 = vmatpush1.bf16.msra.mxu0 %v600
    %625 = vmatprep.subr.bf16.mxu0 0
    %626 = vmatpush1.bf16.msra.mxu0 0
    %627 = vmatprep.subr.bf16.mxu0 0
    %628 = vmatpush1.bf16.msra.mxu0 0
    %629 = vmatprep.subr.bf16.mxu0 0
    %630 = vmatpush1.bf16.msra.mxu0 0
    %631 = vmatprep.subr.bf16.mxu0 0
    %632 = vmatpush1.bf16.msra.mxu0 0
    %633 = vmatprep.subr.bf16.mxu0 0
    %634 = vmatpush1.bf16.msra.mxu0 0
    %635 = vmatprep.subr.bf16.mxu0 0
    %636 = vmatpush1.bf16.msra.mxu0 0
    %637 = vmatprep.subr.bf16.mxu0 0
    %638 = vmatpush1.bf16.msra.mxu0 0
    %639 = vmatprep.subr.bf16.mxu0 0
    %640 = vmatpush1.bf16.msra.mxu0 0
    %641 = vmatprep.mubr.bf16.mxu0 0
    %642 = vmatmul.mubr.bf16.gmra.mrb[0].mxu0 %v535
    %v643 = vpop.f32.mrb[0].mxu0
    %v644 = vadd.f32 %v559, %v643
    %v645 = vpop.f32.mrb[0].mxu0
    %v646 = vpop.f32.mrb[0].mxu0
    %v647 = vadd.f32 %v559, %v646
    %v648 = vpop.f32.mrb[0].mxu0
    %649 = vdwg.mxu0
    %v650 = vmax.f32 %v644, 0.0
    %v651 = vmax.f32 %v647, 0.0
    %v652 = vpack.c.bf16 %v651, %v650
    %s653 = scalar_lea.vmem [#allocation5], 320
    %v654 = vld [vmem:[%s653] sm:$0xf]
    %v655 = vld [vmem:[%s653 + $0x4] sm:$0xf]
    %v656 = vld [vmem:[%s653 + $0x8] sm:$0xf]
    %v657 = vld [vmem:[%s653 + $0xc] sm:$0xf]
    %v658 = vld [vmem:[%s653 + $0x10] sm:$0xf]
    %v659 = vld [vmem:[%s653 + $0x14] sm:$0xf]
    %v660 = vld [vmem:[%s653 + $0x18] sm:$0xf]
    %v661 = vld [vmem:[%s653 + $0x1c] sm:$0xf]
    %v662 = vld [vmem:[%s653 + $0x20] sm:$0xf]
    %v663 = vld [vmem:[%s653 + $0x24] sm:$0xf]
    %v664 = vld [vmem:[%s653 + $0x28] sm:$0xf]
    %v665 = vld [vmem:[%s653 + $0x2c] sm:$0xf]
    %v666 = vld [vmem:[%s653 + $0x30] sm:$0xf]
    %v667 = vld [vmem:[%s653 + $0x34] sm:$0xf]
    %v668 = vld [vmem:[%s653 + $0x38] sm:$0xf]
    %v669 = vld [vmem:[%s653 + $0x3c] sm:$0xf]
    %s670 = scalar_lea.vmem [#allocation7], 5
    %v671 = vld [vmem:[%s670] sm:$0x1]
    %v673 = vlaneseq
    %v674 = vshrl.u32 %v673, 7
    %v675 = vsub.s32 0, %v674
    %v676 = vrot.slane %v671, %v675
    %v694 = vunpack.c.l.b16 %v654
    %v695 = vunpack.c.l.b16 %v655
    %v696 = vunpack.c.l.b16 %v656
    %v697 = vunpack.c.l.b16 %v657
    %v698 = vunpack.c.l.b16 %v658
    %v699 = vunpack.c.l.b16 %v659
    %v700 = vunpack.c.l.b16 %v660
    %v701 = vunpack.c.l.b16 %v661
    %v702 = vunpack.c.l.b16 %v662
    %v703 = vunpack.c.l.b16 %v663
    %v704 = vunpack.c.l.b16 %v664
    %v705 = vunpack.c.l.b16 %v665
    %v706 = vunpack.c.l.b16 %v666
    %v707 = vunpack.c.l.b16 %v667
    %v708 = vunpack.c.l.b16 %v668
    %v709 = vunpack.c.l.b16 %v669
    %v710 = vpack.c.b16 %v695, %v694
    %v711 = vpack.c.b16 %v697, %v696
    %v712 = vpack.c.b16 %v699, %v698
    %v713 = vpack.c.b16 %v701, %v700
    %v714 = vpack.c.b16 %v703, %v702
    %v715 = vpack.c.b16 %v705, %v704
    %v716 = vpack.c.b16 %v707, %v706
    %v717 = vpack.c.b16 %v709, %v708
    %726 = vmatprep.subr.bf16.mxu0 0
    %727 = vmatpush1.bf16.msra.mxu0 %v710
    %728 = vmatprep.subr.bf16.mxu0 0
    %729 = vmatpush1.bf16.msra.mxu0 %v711
    %730 = vmatprep.subr.bf16.mxu0 0
    %731 = vmatpush1.bf16.msra.mxu0 %v712
    %732 = vmatprep.subr.bf16.mxu0 0
    %733 = vmatpush1.bf16.msra.mxu0 %v713
    %734 = vmatprep.subr.bf16.mxu0 0
    %735 = vmatpush1.bf16.msra.mxu0 %v714
    %736 = vmatprep.subr.bf16.mxu0 0
    %737 = vmatpush1.bf16.msra.mxu0 %v715
    %738 = vmatprep.subr.bf16.mxu0 0
    %739 = vmatpush1.bf16.msra.mxu0 %v716
    %740 = vmatprep.subr.bf16.mxu0 0
    %741 = vmatpush1.bf16.msra.mxu0 %v717
    %742 = vmatprep.subr.bf16.mxu0 0
    %743 = vmatpush1.bf16.msra.mxu0 0
    %744 = vmatprep.subr.bf16.mxu0 0
    %745 = vmatpush1.bf16.msra.mxu0 0
    %746 = vmatprep.subr.bf16.mxu0 0
    %747 = vmatpush1.bf16.msra.mxu0 0
    %748 = vmatprep.subr.bf16.mxu0 0
    %749 = vmatpush1.bf16.msra.mxu0 0
    %750 = vmatprep.subr.bf16.mxu0 0
    %751 = vmatpush1.bf16.msra.mxu0 0
    %752 = vmatprep.subr.bf16.mxu0 0
    %753 = vmatpush1.bf16.msra.mxu0 0
    %754 = vmatprep.subr.bf16.mxu0 0
    %755 = vmatpush1.bf16.msra.mxu0 0
    %756 = vmatprep.subr.bf16.mxu0 0
    %757 = vmatpush1.bf16.msra.mxu0 0
    %758 = vmatprep.mubr.bf16.mxu0 0
    %759 = vmatmul.mubr.bf16.gmra.mrb[0].mxu0 %v652
    %v760 = vpop.f32.mrb[0].mxu0
    %v761 = vadd.f32 %v676, %v760
    %v762 = vpop.f32.mrb[0].mxu0
    %v763 = vpop.f32.mrb[0].mxu0
    %v764 = vadd.f32 %v676, %v763
    %v765 = vpop.f32.mrb[0].mxu0
    %766 = vdwg.mxu0
    %v767 = vmax.f32 %v761, 0.0
    %v768 = vmax.f32 %v764, 0.0
    %v769 = vpack.c.bf16 %v768, %v767
    %s770 = scalar_lea.vmem [#allocation5], 384
    %v771 = vld [vmem:[%s770] sm:$0xf]
    %v772 = vld [vmem:[%s770 + $0x4] sm:$0xf]
    %v773 = vld [vmem:[%s770 + $0x8] sm:$0xf]
    %v774 = vld [vmem:[%s770 + $0xc] sm:$0xf]
    %v775 = vld [vmem:[%s770 + $0x10] sm:$0xf]
    %v776 = vld [vmem:[%s770 + $0x14] sm:$0xf]
    %v777 = vld [vmem:[%s770 + $0x18] sm:$0xf]
    %v778 = vld [vmem:[%s770 + $0x1c] sm:$0xf]
    %v779 = vld [vmem:[%s770 + $0x20] sm:$0xf]
    %v780 = vld [vmem:[%s770 + $0x24] sm:$0xf]
    %v781 = vld [vmem:[%s770 + $0x28] sm:$0xf]
    %v782 = vld [vmem:[%s770 + $0x2c] sm:$0xf]
    %v783 = vld [vmem:[%s770 + $0x30] sm:$0xf]
    %v784 = vld [vmem:[%s770 + $0x34] sm:$0xf]
    %v785 = vld [vmem:[%s770 + $0x38] sm:$0xf]
    %v786 = vld [vmem:[%s770 + $0x3c] sm:$0xf]
    %s787 = scalar_lea.vmem [#allocation7], 6
    %v788 = vld [vmem:[%s787] sm:$0x1]
    %v790 = vlaneseq
    %v791 = vshrl.u32 %v790, 7
    %v792 = vsub.s32 0, %v791
    %v793 = vrot.slane %v788, %v792
    %v811 = vunpack.c.l.b16 %v771
    %v812 = vunpack.c.l.b16 %v772
    %v813 = vunpack.c.l.b16 %v773
    %v814 = vunpack.c.l.b16 %v774
    %v815 = vunpack.c.l.b16 %v775
    %v816 = vunpack.c.l.b16 %v776
    %v817 = vunpack.c.l.b16 %v777
    %v818 = vunpack.c.l.b16 %v778
    %v819 = vunpack.c.l.b16 %v779
    %v820 = vunpack.c.l.b16 %v780
    %v821 = vunpack.c.l.b16 %v781
    %v822 = vunpack.c.l.b16 %v782
    %v823 = vunpack.c.l.b16 %v783
    %v824 = vunpack.c.l.b16 %v784
    %v825 = vunpack.c.l.b16 %v785
    %v826 = vunpack.c.l.b16 %v786
    %v827 = vpack.c.b16 %v812, %v811
    %v828 = vpack.c.b16 %v814, %v813
    %v829 = vpack.c.b16 %v816, %v815
    %v830 = vpack.c.b16 %v818, %v817
    %v831 = vpack.c.b16 %v820, %v819
    %v832 = vpack.c.b16 %v822, %v821
    %v833 = vpack.c.b16 %v824, %v823
    %v834 = vpack.c.b16 %v826, %v825
    %843 = vmatprep.subr.bf16.mxu0 0
    %844 = vmatpush1.bf16.msra.mxu0 %v827
    %845 = vmatprep.subr.bf16.mxu0 0
    %846 = vmatpush1.bf16.msra.mxu0 %v828
    %847 = vmatprep.subr.bf16.mxu0 0
    %848 = vmatpush1.bf16.msra.mxu0 %v829
    %849 = vmatprep.subr.bf16.mxu0 0
    %850 = vmatpush1.bf16.msra.mxu0 %v830
    %851 = vmatprep.subr.bf16.mxu0 0
    %852 = vmatpush1.bf16.msra.mxu0 %v831
    %853 = vmatprep.subr.bf16.mxu0 0
    %854 = vmatpush1.bf16.msra.mxu0 %v832
    %855 = vmatprep.subr.bf16.mxu0 0
    %856 = vmatpush1.bf16.msra.mxu0 %v833
    %857 = vmatprep.subr.bf16.mxu0 0
    %858 = vmatpush1.bf16.msra.mxu0 %v834
    %859 = vmatprep.subr.bf16.mxu0 0
    %860 = vmatpush1.bf16.msra.mxu0 0
    %861 = vmatprep.subr.bf16.mxu0 0
    %862 = vmatpush1.bf16.msra.mxu0 0
    %863 = vmatprep.subr.bf16.mxu0 0
    %864 = vmatpush1.bf16.msra.mxu0 0
    %865 = vmatprep.subr.bf16.mxu0 0
    %866 = vmatpush1.bf16.msra.mxu0 0
    %867 = vmatprep.subr.bf16.mxu0 0
    %868 = vmatpush1.bf16.msra.mxu0 0
    %869 = vmatprep.subr.bf16.mxu0 0
    %870 = vmatpush1.bf16.msra.mxu0 0
    %871 = vmatprep.subr.bf16.mxu0 0
    %872 = vmatpush1.bf16.msra.mxu0 0
    %873 = vmatprep.subr.bf16.mxu0 0
    %874 = vmatpush1.bf16.msra.mxu0 0
    %875 = vmatprep.mubr.bf16.mxu0 0
    %876 = vmatmul.mubr.bf16.gmra.mrb[0].mxu0 %v769
    %v877 = vpop.f32.mrb[0].mxu0
    %v878 = vadd.f32 %v793, %v877
    %v879 = vpop.f32.mrb[0].mxu0
    %v880 = vpop.f32.mrb[0].mxu0
    %v881 = vadd.f32 %v793, %v880
    %v882 = vpop.f32.mrb[0].mxu0
    %883 = vdwg.mxu0
    %v884 = vmax.f32 %v878, 0.0
    %v885 = vmax.f32 %v881, 0.0
    %v886 = vpack.c.bf16 %v885, %v884
    %s887 = scalar_lea.vmem [#allocation5], 448
    %v888 = vld [vmem:[%s887] sm:$0xf]
    %v889 = vld [vmem:[%s887 + $0x4] sm:$0xf]
    %v890 = vld [vmem:[%s887 + $0x8] sm:$0xf]
    %v891 = vld [vmem:[%s887 + $0xc] sm:$0xf]
    %v892 = vld [vmem:[%s887 + $0x10] sm:$0xf]
    %v893 = vld [vmem:[%s887 + $0x14] sm:$0xf]
    %v894 = vld [vmem:[%s887 + $0x18] sm:$0xf]
    %v895 = vld [vmem:[%s887 + $0x1c] sm:$0xf]
    %v896 = vld [vmem:[%s887 + $0x20] sm:$0xf]
    %v897 = vld [vmem:[%s887 + $0x24] sm:$0xf]
    %v898 = vld [vmem:[%s887 + $0x28] sm:$0xf]
    %v899 = vld [vmem:[%s887 + $0x2c] sm:$0xf]
    %v900 = vld [vmem:[%s887 + $0x30] sm:$0xf]
    %v901 = vld [vmem:[%s887 + $0x34] sm:$0xf]
    %v902 = vld [vmem:[%s887 + $0x38] sm:$0xf]
    %v903 = vld [vmem:[%s887 + $0x3c] sm:$0xf]
    %s904 = scalar_lea.vmem [#allocation7], 7
    %v905 = vld [vmem:[%s904] sm:$0x1]
    %v907 = vlaneseq
    %v908 = vshrl.u32 %v907, 7
    %v909 = vsub.s32 0, %v908
    %v910 = vrot.slane %v905, %v909
    %v928 = vunpack.c.l.b16 %v888
    %v929 = vunpack.c.l.b16 %v889
    %v930 = vunpack.c.l.b16 %v890
    %v931 = vunpack.c.l.b16 %v891
    %v932 = vunpack.c.l.b16 %v892
    %v933 = vunpack.c.l.b16 %v893
    %v934 = vunpack.c.l.b16 %v894
    %v935 = vunpack.c.l.b16 %v895
    %v936 = vunpack.c.l.b16 %v896
    %v937 = vunpack.c.l.b16 %v897
    %v938 = vunpack.c.l.b16 %v898
    %v939 = vunpack.c.l.b16 %v899
    %v940 = vunpack.c.l.b16 %v900
    %v941 = vunpack.c.l.b16 %v901
    %v942 = vunpack.c.l.b16 %v902
    %v943 = vunpack.c.l.b16 %v903
    %v944 = vpack.c.b16 %v929, %v928
    %v945 = vpack.c.b16 %v931, %v930
    %v946 = vpack.c.b16 %v933, %v932
    %v947 = vpack.c.b16 %v935, %v934
    %v948 = vpack.c.b16 %v937, %v936
    %v949 = vpack.c.b16 %v939, %v938
    %v950 = vpack.c.b16 %v941, %v940
    %v951 = vpack.c.b16 %v943, %v942
    %960 = vmatprep.subr.bf16.mxu0 0
    %961 = vmatpush1.bf16.msra.mxu0 %v944
    %962 = vmatprep.subr.bf16.mxu0 0
    %963 = vmatpush1.bf16.msra.mxu0 %v945
    %964 = vmatprep.subr.bf16.mxu0 0
    %965 = vmatpush1.bf16.msra.mxu0 %v946
    %966 = vmatprep.subr.bf16.mxu0 0
    %967 = vmatpush1.bf16.msra.mxu0 %v947
    %968 = vmatprep.subr.bf16.mxu0 0
    %969 = vmatpush1.bf16.msra.mxu0 %v948
    %970 = vmatprep.subr.bf16.mxu0 0
    %971 = vmatpush1.bf16.msra.mxu0 %v949
    %972 = vmatprep.subr.bf16.mxu0 0
    %973 = vmatpush1.bf16.msra.mxu0 %v950
    %974 = vmatprep.subr.bf16.mxu0 0
    %975 = vmatpush1.bf16.msra.mxu0 %v951
    %976 = vmatprep.subr.bf16.mxu0 0
    %977 = vmatpush1.bf16.msra.mxu0 0
    %978 = vmatprep.subr.bf16.mxu0 0
    %979 = vmatpush1.bf16.msra.mxu0 0
    %980 = vmatprep.subr.bf16.mxu0 0
    %981 = vmatpush1.bf16.msra.mxu0 0
    %982 = vmatprep.subr.bf16.mxu0 0
    %983 = vmatpush1.bf16.msra.mxu0 0
    %984 = vmatprep.subr.bf16.mxu0 0
    %985 = vmatpush1.bf16.msra.mxu0 0
    %986 = vmatprep.subr.bf16.mxu0 0
    %987 = vmatpush1.bf16.msra.mxu0 0
    %988 = vmatprep.subr.bf16.mxu0 0
    %989 = vmatpush1.bf16.msra.mxu0 0
    %990 = vmatprep.subr.bf16.mxu0 0
    %991 = vmatpush1.bf16.msra.mxu0 0
    %992 = vmatprep.mubr.bf16.mxu0 0
    %993 = vmatmul.mubr.bf16.gmra.mrb[0].mxu0 %v886
    %v994 = vpop.f32.mrb[0].mxu0
    %v995 = vadd.f32 %v910, %v994
    %v996 = vpop.f32.mrb[0].mxu0
    %v997 = vpop.f32.mrb[0].mxu0
    %v998 = vadd.f32 %v910, %v997
    %v999 = vpop.f32.mrb[0].mxu0
    %1000 = vdwg.mxu0
    %1001 = vst [vmem:[#allocation9] sm:$0xff] %v995
    %1002 = vst [vmem:[#allocation9 + $0x8] sm:$0xff] %v998
    // Predicated region
    $region26: #{tpu_custom_call.1} parent=1 // pred_check
      _
    $region27: #{tpu_custom_call.1} parent=1 // pred_check_branch
      %1004 = sbr.rel (0) target = $region29
    $region28: #{tpu_custom_call.1} parent=1 // pred_region
      %s1006 = ssub.s32 256, 256
      %1007 = vsyncadd [#allocation4], %s1006
      %s1008 = sshll.u32 [#allocation8], 4
      %s1009 = int_to_ptr.vmem [resolvable:$true] %s1008
      %1014 = dma.vmem_to_hbm [thread:$0]  %s1009, 256, %s3, [#allocation4], 128, 128, 8
    $region29: #{tpu_custom_call.1} parent=1 // pred_fallthru
      _
    // Predicated region
    $region30: #{tpu_custom_call.1} parent=1 // pred_check
      _
    $region31: #{tpu_custom_call.1} parent=1 // pred_check_branch
      %1016 = sbr.rel (0) target = $region33
    $region32: #{tpu_custom_call.1} parent=1 // pred_region
      %s1018 = ssub.s32 256, 256
      %1019 = vsyncadd [#allocation10], %s1018
      %s1020 = sshll.u32 [#allocation9], 4
      %s1021 = int_to_ptr.vmem [resolvable:$true] %s1020
      %1026 = dma.vmem_to_hbm [thread:$0]  %s1021, 256, %s4, [#allocation10], 128, 128, 8
    $region33: #{tpu_custom_call.1} parent=1 // pred_fallthru
      _
    // Predicated region
    $region34: #{tpu_custom_call.1} parent=1 // pred_check
      _
    $region35: #{tpu_custom_call.1} parent=1 // pred_check_branch
      %1028 = sbr.rel (0) target = $region37
    $region36: #{tpu_custom_call.1} parent=1 // pred_region
      %1029 = dma.done [#allocation4], 256
    $region37: #{tpu_custom_call.1} parent=1 // pred_fallthru
      _
    // Predicated region
    $region38: #{tpu_custom_call.1} parent=1 // pred_check
      _
    $region39: #{tpu_custom_call.1} parent=1 // pred_check_branch
      %1031 = sbr.rel (0) target = $region41
    $region40: #{tpu_custom_call.1} parent=1 // pred_region
      %1032 = dma.done [#allocation10], 256
    $region41: #{tpu_custom_call.1} parent=1 // pred_fallthru
      _
    %1033 = vsyncpa [#allocation3], 1
    %1034 = vsyncpa [#allocation6], 1
    %1035 = vsyncpa [#allocation4], 1
    %1036 = vsyncpa [#allocation10], 1

</llo_original>
